<compile_context>
chip_gen: v5e
topology: v5e:2x2
jax: 0.10.0
libtpu: 0.0.40
codegen_flags: <defaults>
</compile_context>

<pallas_src>
import math
import jax
import jax.numpy as jnp
from jax import lax
from jax.experimental import pallas as pl
from jax.experimental.pallas import tpu as pltpu

LANE = 128
SUBLANE = 8


def _round_up(n, m):
    return ((n + m - 1) // m) * m


# ----------------------------------------------------------------------------
# Kernel
# ----------------------------------------------------------------------------
def _build_fused_mlp_kernel(num_layers, valid_out, out_pad, compute_dtype):
    """softmax(relu(... relu(x@W0+b0) ... @Wn + bn)) entirely in VMEM."""

    def kernel(*refs):
        x_ref = refs[0]
        o_ref = refs[-1]
        wb = refs[1:-1]

        h = x_ref[...].astype(jnp.float32)
        for i in range(num_layers):
            w = wb[2 * i][...]                     # (K_pad, N_pad), compute_dtype
            b = wb[2 * i + 1][...]                 # (1, N_pad) f32, broadcasts over rows
            h = jnp.dot(h.astype(compute_dtype), w,
                        preferred_element_type=jnp.float32) + b
            h = jnp.maximum(h, 0.0)                # module applies ReLU on every layer
            # dropout: identity in eval mode

        # Numerically stable softmax over valid lanes; skip mask if none padded.
        if valid_out != out_pad:
            lane = lax.broadcasted_iota(jnp.int32, h.shape, dimension=1)
            h = jnp.where(lane < valid_out, h, -jnp.inf)
        m = jnp.max(h, axis=-1, keepdims=True)
        e = jnp.exp(h - m)
        denom = jnp.sum(e, axis=-1, keepdims=True)
        o_ref[...] = (e * pl.reciprocal(denom, approx=False)).astype(o_ref.dtype)

    return kernel


# ----------------------------------------------------------------------------
# One-time parameter padding (outside the hot path)
# ----------------------------------------------------------------------------
def pad_mlp_params(params, input_dim, compute_dtype=jnp.float32, lane_align=LANE):
    """Zero-pad weights/biases once.

    First-layer K dim stays == input_dim (x is passed unpadded); every layer's
    N dim (and hence later K dims) is padded to a multiple of `lane_align`.
    Zero rows/cols + zero bias keep padded lanes exactly 0 through each ReLU.
    """
    feat = [input_dim] + [w.shape[1] for (w, _) in params]
    feat_pad = [input_dim] + [_round_up(d, lane_align) for d in feat[1:]]
    padded = []
    for li, (w, b) in enumerate(params):
        d_in, d_out = w.shape
        kp, np_ = feat_pad[li], feat_pad[li + 1]
        w_p = jnp.zeros((kp, np_), compute_dtype).at[:d_in, :d_out].set(
            w.astype(compute_dtype))
        b_p = jnp.zeros((1, np_), jnp.float32).at[:, :d_out].set(
            b.reshape(1, d_out).astype(jnp.float32))
        padded.append((w_p, b_p))
    return jax.block_until_ready(padded), feat_pad


# ----------------------------------------------------------------------------
# Forward
# ----------------------------------------------------------------------------
def _pick_row_tile(batch, weight_bytes, in_feat, widest_pad, out_pad):
    if batch <= SUBLANE:
        return batch  # block dim == full array dim -> exempt from the 8-row rule
    # VMEM budget left for activation tiles (double-buffered x/out + live h).
    bytes_per_row = 4 * (2 * in_feat + 2 * out_pad + 3 * widest_pad)
    act_budget = max(8 << 20, (48 << 20) - weight_bytes)
    cap = int(act_budget // max(bytes_per_row, 1))
    cap = max(SUBLANE, min(1024, (cap // SUBLANE) * SUBLANE))
    # Aim for >=2 grid steps so the "parallel" batch axis uses both v7x cores.
    half = _round_up((batch + 1) // 2, SUBLANE)
    return max(SUBLANE, min(cap, half))


def _make_mlp_call(kernel, batch, in_feat, out_pad, row_tile, grid,
                   wb_shapes, vmem_limit, resident_vmem):
    x_spec = pl.BlockSpec((row_tile, in_feat), lambda i: (i, 0))
    if resident_vmem:
        # Whole array lives in VMEM for the call: single-buffered (no pipelining),
        # half the VMEM of the default double-buffered blocked spec.
        wb_specs = [pl.BlockSpec(memory_space=pltpu.MemorySpace.VMEM)
                    for _ in wb_shapes]
    else:
        wb_specs = [pl.BlockSpec(shape, lambda i: (0, 0)) for shape in wb_shapes]
    out_spec = pl.BlockSpec((row_tile, out_pad), lambda i: (i, 0))  # lane-dense stores
    return pl.pallas_call(
        kernel,
        out_shape=jax.ShapeDtypeStruct((batch, out_pad), jnp.float32),
        grid=grid,
        in_specs=[x_spec] + wb_specs,
        out_specs=out_spec,
        compiler_params=pltpu.CompilerParams(
            dimension_semantics=("parallel",),      # batch tiles shard across TCs
            vmem_limit_bytes=vmem_limit),
    )


def mlp_forward(x, padded_params, feat_pad, out_dim):
    """x: (batch, input_dim) f32; padded_params from pad_mlp_params."""
    batch, in_feat = x.shape
    assert in_feat == feat_pad[0]
    num_layers = len(padded_params)
    out_pad = feat_pad[-1]

    w_bytes = sum(int(w.size) * w.dtype.itemsize + int(b.size) * b.dtype.itemsize
                  for (w, b) in padded_params)
    widest = max(feat_pad)
    row_tile = _pick_row_tile(batch, w_bytes, in_feat, widest, out_pad)
    grid = (pl.cdiv(batch, row_tile),)

    # VMEM limit from the working set (weights + tiles + live activations) + headroom.
    bytes_per_row = 4 * (2 * in_feat + 2 * out_pad + 3 * widest)
    vmem_limit = int(min(64 << 20,
                         max(32 << 20,
                             2 * w_bytes + 2 * row_tile * bytes_per_row + (4 << 20))))

    kernel = _build_fused_mlp_kernel(num_layers, out_dim, out_pad,
                                     padded_params[0][0].dtype)
    wb_shapes = [t.shape for wb in padded_params for t in wb]
    flat = [x] + [t for wb in padded_params for t in wb]

    try:
        fn = _make_mlp_call(kernel, batch, in_feat, out_pad, row_tile, grid,
                            wb_shapes, vmem_limit, resident_vmem=True)
        out_padded = fn(*flat)
    except Exception:
        # Fallback: blocked constant-index specs (default double-buffered).
        fn = _make_mlp_call(kernel, batch, in_feat, out_pad, row_tile, grid,
                            wb_shapes, vmem_limit, resident_vmem=False)
        out_padded = fn(*flat)

    return out_padded[:, :out_dim]


# ----------------------------------------------------------------------------
# Init + pure-JAX reference
# ----------------------------------------------------------------------------
def init_mlp_params(key, input_dim, hidden_dims, out_dim):
    """Deterministic init matching nn.Linear shapes (kaiming-uniform-ish)."""
    num_layers = len(hidden_dims) + 1
    dims = []
    for i in range(num_layers):
        d1 = input_dim if i == 0 else hidden_dims[i - 1]
        d2 = out_dim if i == num_layers - 1 else hidden_dims[i]
        dims.append((d1, d2))

    params = []
    for (d1, d2) in dims:
        key, kw, kb = jax.random.split(key, 3)
        bound = 1.0 / math.sqrt(d1)
        w = jax.random.uniform(kw, (d1, d2), jnp.float32, -bound, bound)  # (in, out)
        b = jax.random.uniform(kb, (1, d2), jnp.float32, -bound, bound)
        params.append((w, b))
    return params


def mlp_reference(x, params):
    for (w, b) in params:
        x = jnp.maximum(x @ w + b, 0.0)
    return jax.nn.softmax(x, axis=-1)


if __name__ == "__main__":
    key = jax.random.PRNGKey(0)
    kx, kp = jax.random.split(key)

    batch = 8
    input_dim = 32
    hidden_dims = [64, 32]
    out_dim = 16
    dropout = 0.5  # identity at inference

    x = jax.random.normal(kx, (batch, input_dim), jnp.float32)
    params = init_mlp_params(kp, input_dim, hidden_dims, out_dim)

    # One-time padding outside the hot path (the pallas_call is the only op per forward).
    padded_params, feat_pad = pad_mlp_params(params, input_dim)

    out = mlp_forward(x, padded_params, feat_pad, out_dim)
    out = jax.block_until_ready(out)

    ref = mlp_reference(x, params)
    assert out.shape == (batch, out_dim)
    assert jnp.allclose(out, ref, atol=1e-5, rtol=1e-5), "mismatch vs reference"
    assert jnp.allclose(jnp.sum(out, axis=-1), 1.0, atol=1e-5), "softmax rows must sum to 1"

    print("KERNEL_OK")
</pallas_src>

<mosaic_0001>
module attributes {stable_mosaic.version = 11 : i64} {
  func.func @kernel(%arg0: i32, %arg1: memref<8x32xf32, #tpu.memory_space<vmem>>, %arg2: memref<32x128xf32, #tpu.memory_space<vmem>>, %arg3: memref<1x128xf32, #tpu.memory_space<vmem>>, %arg4: memref<128x128xf32, #tpu.memory_space<vmem>>, %arg5: memref<1x128xf32, #tpu.memory_space<vmem>>, %arg6: memref<128x128xf32, #tpu.memory_space<vmem>>, %arg7: memref<1x128xf32, #tpu.memory_space<vmem>>, %arg8: memref<8x128xf32, #tpu.memory_space<vmem>>) attributes {dimension_semantics = [#tpu.dimension_semantics<parallel>], iteration_bounds = array<i64: 1>, scalar_prefetch = 0 : i64, scratch_operands = 0 : i64, tpu.core_type = #tpu.core_type<tc>, window_params = [{transform_indices = @transform_0, window_bounds = array<i64: 8, 32>}, {pipeline_mode = #tpu.pipeline_mode<synchronous>, transform_indices = @transform_1, window_bounds = array<i64: 32, 128>}, {pipeline_mode = #tpu.pipeline_mode<synchronous>, transform_indices = @transform_2, window_bounds = array<i64: 1, 128>}, {pipeline_mode = #tpu.pipeline_mode<synchronous>, transform_indices = @transform_3, window_bounds = array<i64: 128, 128>}, {pipeline_mode = #tpu.pipeline_mode<synchronous>, transform_indices = @transform_4, window_bounds = array<i64: 1, 128>}, {pipeline_mode = #tpu.pipeline_mode<synchronous>, transform_indices = @transform_5, window_bounds = array<i64: 128, 128>}, {pipeline_mode = #tpu.pipeline_mode<synchronous>, transform_indices = @transform_6, window_bounds = array<i64: 1, 128>}, {transform_indices = @transform_7, window_bounds = array<i64: 8, 128>}]} {
    %c0 = arith.constant 0 : index
    %c0_0 = arith.constant 0 : index
    %0 = vector.load %arg1[%c0, %c0_0] : memref<8x32xf32, #tpu.memory_space<vmem>>, vector<8x32xf32>
    %c0_1 = arith.constant 0 : index
    %c0_2 = arith.constant 0 : index
    %1 = vector.load %arg2[%c0_1, %c0_2] : memref<32x128xf32, #tpu.memory_space<vmem>>, vector<32x128xf32>
    %c0_3 = arith.constant 0 : index
    %c0_4 = arith.constant 0 : index
    %2 = vector.load %arg3[%c0_3, %c0_4] : memref<1x128xf32, #tpu.memory_space<vmem>>, vector<1x128xf32>
    %cst = arith.constant dense<0.000000e+00> : vector<8x128xf32>
    %3 = tpu.matmul %0, %1, %cst {dimension_numbers = #tpu.dot_dimension_numbers<[1], [0], [0], [1], [0, 0, 1, 1], [], []>} : vector<8x32xf32>, vector<32x128xf32>, vector<8x128xf32> -> vector<8x128xf32>
    %4 = vector.broadcast %2 : vector<1x128xf32> to vector<8x128xf32>
    %5 = arith.addf %3, %4 : vector<8x128xf32>
    %cst_5 = arith.constant 0.000000e+00 : f32
    %6 = vector.broadcast %cst_5 : f32 to vector<8x128xf32>
    %7 = arith.maximumf %5, %6 : vector<8x128xf32>
    %c0_6 = arith.constant 0 : index
    %c0_7 = arith.constant 0 : index
    %8 = vector.load %arg4[%c0_6, %c0_7] : memref<128x128xf32, #tpu.memory_space<vmem>>, vector<128x128xf32>
    %c0_8 = arith.constant 0 : index
    %c0_9 = arith.constant 0 : index
    %9 = vector.load %arg5[%c0_8, %c0_9] : memref<1x128xf32, #tpu.memory_space<vmem>>, vector<1x128xf32>
    %cst_10 = arith.constant dense<0.000000e+00> : vector<8x128xf32>
    %10 = tpu.matmul %7, %8, %cst_10 {dimension_numbers = #tpu.dot_dimension_numbers<[1], [0], [0], [1], [0, 0, 1, 1], [], []>} : vector<8x128xf32>, vector<128x128xf32>, vector<8x128xf32> -> vector<8x128xf32>
    %11 = vector.broadcast %9 : vector<1x128xf32> to vector<8x128xf32>
    %12 = arith.addf %10, %11 : vector<8x128xf32>
    %cst_11 = arith.constant 0.000000e+00 : f32
    %13 = vector.broadcast %cst_11 : f32 to vector<8x128xf32>
    %14 = arith.maximumf %12, %13 : vector<8x128xf32>
    %c0_12 = arith.constant 0 : index
    %c0_13 = arith.constant 0 : index
    %15 = vector.load %arg6[%c0_12, %c0_13] : memref<128x128xf32, #tpu.memory_space<vmem>>, vector<128x128xf32>
    %c0_14 = arith.constant 0 : index
    %c0_15 = arith.constant 0 : index
    %16 = vector.load %arg7[%c0_14, %c0_15] : memref<1x128xf32, #tpu.memory_space<vmem>>, vector<1x128xf32>
    %cst_16 = arith.constant dense<0.000000e+00> : vector<8x128xf32>
    %17 = tpu.matmul %14, %15, %cst_16 {dimension_numbers = #tpu.dot_dimension_numbers<[1], [0], [0], [1], [0, 0, 1, 1], [], []>} : vector<8x128xf32>, vector<128x128xf32>, vector<8x128xf32> -> vector<8x128xf32>
    %18 = vector.broadcast %16 : vector<1x128xf32> to vector<8x128xf32>
    %19 = arith.addf %17, %18 : vector<8x128xf32>
    %cst_17 = arith.constant 0.000000e+00 : f32
    %20 = vector.broadcast %cst_17 : f32 to vector<8x128xf32>
    %21 = arith.maximumf %19, %20 : vector<8x128xf32>
    %22 = tpu.iota {dimensions = array<i32: 1>} : vector<8x128xi32>
    %c16_i32 = arith.constant 16 : i32
    %23 = vector.broadcast %c16_i32 : i32 to vector<8x128xi32>
    %24 = arith.cmpi slt, %22, %23 : vector<8x128xi32>
    %cst_18 = arith.constant 0xFF800000 : f32
    %25 = vector.broadcast %cst_18 : f32 to vector<8x128xf32>
    %26 = arith.select %24, %21, %25 : vector<8x128xi1>, vector<8x128xf32>
    %cst_19 = arith.constant dense<0xFF800000> : vector<8xf32>
    %27 = vector.multi_reduction <maximumf>, %26, %cst_19 [1] : vector<8x128xf32> to vector<8xf32>
    %28 = vector.shape_cast %27 : vector<8xf32> to vector<8x1xf32>
    %29 = vector.broadcast %28 : vector<8x1xf32> to vector<8x128xf32>
    %30 = arith.subf %26, %29 : vector<8x128xf32>
    %31 = math.exp %30 : vector<8x128xf32>
    %cst_20 = arith.constant dense<0.000000e+00> : vector<8xf32>
    %32 = vector.multi_reduction <add>, %31, %cst_20 [1] : vector<8x128xf32> to vector<8xf32>
    %33 = vector.shape_cast %32 : vector<8xf32> to vector<8x1xf32>
    %34 = tpu.reciprocal %33 : vector<8x1xf32> -> vector<8x1xf32>
    %35 = vector.broadcast %34 : vector<8x1xf32> to vector<8x128xf32>
    %36 = arith.mulf %31, %35 : vector<8x128xf32>
    %c0_21 = arith.constant 0 : index
    %c0_22 = arith.constant 0 : index
    %37 = vector.load %arg8[%c0_21, %c0_22] : memref<8x128xf32, #tpu.memory_space<vmem>>, vector<8x128xf32>
    tpu.vector_store %arg8[%c0_21, %c0_22], %36 {strides = array<i32>} : memref<8x128xf32, #tpu.memory_space<vmem>>, vector<8x128xf32>,
    return
  }
  func.func @transform_0(%arg0: i32) -> (i32, i32) {
    %c0_i32 = arith.constant 0 : i32
    %c0_i32_0 = arith.constant 0 : i32
    return %arg0, %c0_i32 : i32, i32
  }
  func.func @transform_1(%arg0: i32) -> (i32, i32) {
    %c0_i32 = arith.constant 0 : i32
    %c0_i32_0 = arith.constant 0 : i32
    %c0_i32_1 = arith.constant 0 : i32
    return %c0_i32, %c0_i32_0 : i32, i32
  }
  func.func @transform_2(%arg0: i32) -> (i32, i32) {
    %c0_i32 = arith.constant 0 : i32
    %c0_i32_0 = arith.constant 0 : i32
    %c0_i32_1 = arith.constant 0 : i32
    return %c0_i32, %c0_i32_0 : i32, i32
  }
  func.func @transform_3(%arg0: i32) -> (i32, i32) {
    %c0_i32 = arith.constant 0 : i32
    %c0_i32_0 = arith.constant 0 : i32
    %c0_i32_1 = arith.constant 0 : i32
    return %c0_i32, %c0_i32_0 : i32, i32
  }
  func.func @transform_4(%arg0: i32) -> (i32, i32) {
    %c0_i32 = arith.constant 0 : i32
    %c0_i32_0 = arith.constant 0 : i32
    %c0_i32_1 = arith.constant 0 : i32
    return %c0_i32, %c0_i32_0 : i32, i32
  }
  func.func @transform_5(%arg0: i32) -> (i32, i32) {
    %c0_i32 = arith.constant 0 : i32
    %c0_i32_0 = arith.constant 0 : i32
    %c0_i32_1 = arith.constant 0 : i32
    return %c0_i32, %c0_i32_0 : i32, i32
  }
  func.func @transform_6(%arg0: i32) -> (i32, i32) {
    %c0_i32 = arith.constant 0 : i32
    %c0_i32_0 = arith.constant 0 : i32
    %c0_i32_1 = arith.constant 0 : i32
    return %c0_i32, %c0_i32_0 : i32, i32
  }
  func.func @transform_7(%arg0: i32) -> (i32, i32) {
    %c0_i32 = arith.constant 0 : i32
    %c0_i32_0 = arith.constant 0 : i32
    return %arg0, %c0_i32 : i32, i32
  }
}

module attributes {stable_mosaic.version = 11 : i64} {
  func.func @kernel(%arg0: i32, %arg1: memref<8x32xf32, #tpu.memory_space<vmem>>, %arg2: memref<32x128xf32, #tpu.memory_space<vmem>>, %arg3: memref<1x128xf32, #tpu.memory_space<vmem>>, %arg4: memref<128x128xf32, #tpu.memory_space<vmem>>, %arg5: memref<1x128xf32, #tpu.memory_space<vmem>>, %arg6: memref<128x128xf32, #tpu.memory_space<vmem>>, %arg7: memref<1x128xf32, #tpu.memory_space<vmem>>, %arg8: memref<8x128xf32, #tpu.memory_space<vmem>>) attributes {dimension_semantics = [#tpu.dimension_semantics<parallel>], iteration_bounds = array<i64: 1>, scalar_prefetch = 0 : i64, scratch_operands = 0 : i64, tpu.core_type = #tpu.core_type<tc>, window_params = [{transform_indices = @transform_0, window_bounds = array<i64: 8, 32>}, {pipeline_mode = #tpu.pipeline_mode<synchronous>, transform_indices = @transform_1, window_bounds = array<i64: 32, 128>}, {pipeline_mode = #tpu.pipeline_mode<synchronous>, transform_indices = @transform_2, window_bounds = array<i64: 1, 128>}, {pipeline_mode = #tpu.pipeline_mode<synchronous>, transform_indices = @transform_3, window_bounds = array<i64: 128, 128>}, {pipeline_mode = #tpu.pipeline_mode<synchronous>, transform_indices = @transform_4, window_bounds = array<i64: 1, 128>}, {pipeline_mode = #tpu.pipeline_mode<synchronous>, transform_indices = @transform_5, window_bounds = array<i64: 128, 128>}, {pipeline_mode = #tpu.pipeline_mode<synchronous>, transform_indices = @transform_6, window_bounds = array<i64: 1, 128>}, {transform_indices = @transform_7, window_bounds = array<i64: 8, 128>}]} {
    %c0 = arith.constant 0 : index
    %c0_0 = arith.constant 0 : index
    %0 = vector.load %arg1[%c0, %c0_0] : memref<8x32xf32, #tpu.memory_space<vmem>>, vector<8x32xf32>
    %c0_1 = arith.constant 0 : index
    %c0_2 = arith.constant 0 : index
    %1 = vector.load %arg2[%c0_1, %c0_2] : memref<32x128xf32, #tpu.memory_space<vmem>>, vector<32x128xf32>
    %c0_3 = arith.constant 0 : index
    %c0_4 = arith.constant 0 : index
    %2 = vector.load %arg3[%c0_3, %c0_4] : memref<1x128xf32, #tpu.memory_space<vmem>>, vector<1x128xf32>
    %cst = arith.constant dense<0.000000e+00> : vector<8x128xf32>
    %3 = tpu.matmul %0, %1, %cst {dimension_numbers = #tpu.dot_dimension_numbers<[1], [0], [0], [1], [0, 0, 1, 1], [], []>} : vector<8x32xf32>, vector<32x128xf32>, vector<8x128xf32> -> vector<8x128xf32>
    %4 = vector.broadcast %2 : vector<1x128xf32> to vector<8x128xf32>
    %5 = arith.addf %3, %4 : vector<8x128xf32>
    %cst_5 = arith.constant 0.000000e+00 : f32
    %6 = vector.broadcast %cst_5 : f32 to vector<8x128xf32>
    %7 = arith.maximumf %5, %6 : vector<8x128xf32>
    %c0_6 = arith.constant 0 : index
    %c0_7 = arith.constant 0 : index
    %8 = vector.load %arg4[%c0_6, %c0_7] : memref<128x128xf32, #tpu.memory_space<vmem>>, vector<128x128xf32>
    %c0_8 = arith.constant 0 : index
    %c0_9 = arith.constant 0 : index
    %9 = vector.load %arg5[%c0_8, %c0_9] : memref<1x128xf32, #tpu.memory_space<vmem>>, vector<1x128xf32>
    %cst_10 = arith.constant dense<0.000000e+00> : vector<8x128xf32>
    %10 = tpu.matmul %7, %8, %cst_10 {dimension_numbers = #tpu.dot_dimension_numbers<[1], [0], [0], [1], [0, 0, 1, 1], [], []>} : vector<8x128xf32>, vector<128x128xf32>, vector<8x128xf32> -> vector<8x128xf32>
    %11 = vector.broadcast %9 : vector<1x128xf32> to vector<8x128xf32>
    %12 = arith.addf %10, %11 : vector<8x128xf32>
    %cst_11 = arith.constant 0.000000e+00 : f32
    %13 = vector.broadcast %cst_11 : f32 to vector<8x128xf32>
    %14 = arith.maximumf %12, %13 : vector<8x128xf32>
    %c0_12 = arith.constant 0 : index
    %c0_13 = arith.constant 0 : index
    %15 = vector.load %arg6[%c0_12, %c0_13] : memref<128x128xf32, #tpu.memory_space<vmem>>, vector<128x128xf32>
    %c0_14 = arith.constant 0 : index
    %c0_15 = arith.constant 0 : index
    %16 = vector.load %arg7[%c0_14, %c0_15] : memref<1x128xf32, #tpu.memory_space<vmem>>, vector<1x128xf32>
    %cst_16 = arith.constant dense<0.000000e+00> : vector<8x128xf32>
    %17 = tpu.matmul %14, %15, %cst_16 {dimension_numbers = #tpu.dot_dimension_numbers<[1], [0], [0], [1], [0, 0, 1, 1], [], []>} : vector<8x128xf32>, vector<128x128xf32>, vector<8x128xf32> -> vector<8x128xf32>
    %18 = vector.broadcast %16 : vector<1x128xf32> to vector<8x128xf32>
    %19 = arith.addf %17, %18 : vector<8x128xf32>
    %cst_17 = arith.constant 0.000000e+00 : f32
    %20 = vector.broadcast %cst_17 : f32 to vector<8x128xf32>
    %21 = arith.maximumf %19, %20 : vector<8x128xf32>
    %22 = tpu.iota {dimensions = array<i32: 1>} : vector<8x128xi32>
    %c16_i32 = arith.constant 16 : i32
    %23 = vector.broadcast %c16_i32 : i32 to vector<8x128xi32>
    %24 = arith.cmpi slt, %22, %23 : vector<8x128xi32>
    %cst_18 = arith.constant 0xFF800000 : f32
    %25 = vector.broadcast %cst_18 : f32 to vector<8x128xf32>
    %26 = arith.select %24, %21, %25 : vector<8x128xi1>, vector<8x128xf32>
    %cst_19 = arith.constant dense<0xFF800000> : vector<8xf32>
    %27 = vector.multi_reduction <maximumf>, %26, %cst_19 [1] : vector<8x128xf32> to vector<8xf32>
    %28 = vector.shape_cast %27 : vector<8xf32> to vector<8x1xf32>
    %29 = vector.broadcast %28 : vector<8x1xf32> to vector<8x128xf32>
    %30 = arith.subf %26, %29 : vector<8x128xf32>
    %31 = math.exp %30 : vector<8x128xf32>
    %cst_20 = arith.constant dense<0.000000e+00> : vector<8xf32>
    %32 = vector.multi_reduction <add>, %31, %cst_20 [1] : vector<8x128xf32> to vector<8xf32>
    %33 = vector.shape_cast %32 : vector<8xf32> to vector<8x1xf32>
    %34 = tpu.reciprocal %33 : vector<8x1xf32> -> vector<8x1xf32>
    %35 = vector.broadcast %34 : vector<8x1xf32> to vector<8x128xf32>
    %36 = arith.mulf %31, %35 : vector<8x128xf32>
    %c0_21 = arith.constant 0 : index
    %c0_22 = arith.constant 0 : index
    %37 = vector.load %arg8[%c0_21, %c0_22] : memref<8x128xf32, #tpu.memory_space<vmem>>, vector<8x128xf32>
    tpu.vector_store %arg8[%c0_21, %c0_22], %36 {strides = array<i32>} : memref<8x128xf32, #tpu.memory_space<vmem>>, vector<8x128xf32>,
    return
  }
  func.func @transform_0(%arg0: i32) -> (i32, i32) {
    %c0_i32 = arith.constant 0 : i32
    %c0_i32_0 = arith.constant 0 : i32
    return %arg0, %c0_i32 : i32, i32
  }
  func.func @transform_1(%arg0: i32) -> (i32, i32) {
    %c0_i32 = arith.constant 0 : i32
    %c0_i32_0 = arith.constant 0 : i32
    %c0_i32_1 = arith.constant 0 : i32
    return %c0_i32, %c0_i32_0 : i32, i32
  }
  func.func @transform_2(%arg0: i32) -> (i32, i32) {
    %c0_i32 = arith.constant 0 : i32
    %c0_i32_0 = arith.constant 0 : i32
    %c0_i32_1 = arith.constant 0 : i32
    return %c0_i32, %c0_i32_0 : i32, i32
  }
  func.func @transform_3(%arg0: i32) -> (i32, i32) {
    %c0_i32 = arith.constant 0 : i32
    %c0_i32_0 = arith.constant 0 : i32
    %c0_i32_1 = arith.constant 0 : i32
    return %c0_i32, %c0_i32_0 : i32, i32
  }
  func.func @transform_4(%arg0: i32) -> (i32, i32) {
    %c0_i32 = arith.constant 0 : i32
    %c0_i32_0 = arith.constant 0 : i32
    %c0_i32_1 = arith.constant 0 : i32
    return %c0_i32, %c0_i32_0 : i32, i32
  }
  func.func @transform_5(%arg0: i32) -> (i32, i32) {
    %c0_i32 = arith.constant 0 : i32
    %c0_i32_0 = arith.constant 0 : i32
    %c0_i32_1 = arith.constant 0 : i32
    return %c0_i32, %c0_i32_0 : i32, i32
  }
  func.func @transform_6(%arg0: i32) -> (i32, i32) {
    %c0_i32 = arith.constant 0 : i32
    %c0_i32_0 = arith.constant 0 : i32
    %c0_i32_1 = arith.constant 0 : i32
    return %c0_i32, %c0_i32_0 : i32, i32
  }
  func.func @transform_7(%arg0: i32) -> (i32, i32) {
    %c0_i32 = arith.constant 0 : i32
    %c0_i32_0 = arith.constant 0 : i32
    return %arg0, %c0_i32 : i32, i32
  }
}

</mosaic_0001>

<llo_original>
// kernel: tpu_custom_call.1
$region0: #{tpu_custom_call.1}
  #allocation0 [shape = 'u32[]', space=smem, size = 0x4, offset = 0x4, fixed_abs, tag = 'smem constant byte address 0x4 - core index']
  #allocation1 [shape = 'u32[72,128]{1,0:T(1,128)}', space=vmem, size = 0x9000, scoped, tag = 'internal scratch']
  %s0 = inlined_call_operand.hbm [shape: f32[8,32], index: 0, kind: input, shape index: {}]
  %s1 = inlined_call_operand.hbm [shape: f32[32,128], index: 1, kind: input, shape index: {}]
  %s2 = inlined_call_operand.vmem [shape: f32[1,128], index: 2, kind: input, shape index: {}]
  %s3 = inlined_call_operand.hbm [shape: f32[128,128], index: 3, kind: input, shape index: {}]
  %s4 = inlined_call_operand.vmem [shape: f32[1,128], index: 4, kind: input, shape index: {}]
  %s5 = inlined_call_operand.hbm [shape: f32[128,128], index: 5, kind: input, shape index: {}]
  %s6 = inlined_call_operand.vmem [shape: f32[1,128], index: 6, kind: input, shape index: {}]
  %s7 = inlined_call_operand.hbm [shape: f32[8,128], index: 7, kind: output, shape index: {}]
  %s8 = sld [smem:[#allocation0]]
  $region54: #{tpu_custom_call.1} parent=0
    _
  %s10 = ssub.s32 1, %s8
  %s11 = scalar_select 0, %s10, %s8
  $region1: #{tpu_custom_call.1} parent=0
    #allocation2 [shape = 'u8[4096]{0}', space=vmem, size = 0x1000, scoped, tag = 'input window, operand 0, single buffered']
    #allocation3 [shape = 's32[1]{0}', space=sflag, size = 0x4, scoped, tag = 'scoped memory for tpu_custom_call.1']
    #allocation4 [shape = 's32[1]{0}', space=sflag, size = 0x4, scoped, tag = 'scoped memory for tpu_custom_call.1']
    #allocation5 [shape = 'u8[16384]{0}', space=vmem, size = 0x4000, scoped, tag = 'input window, operand 1, single buffered']
    #allocation6 [shape = 's32[1]{0}', space=sflag, size = 0x4, scoped, tag = 'scoped memory for tpu_custom_call.1']
    #allocation7 [shape = 'u8[65536]{0}', space=vmem, size = 0x10000, scoped, tag = 'input window, operand 3, single buffered']
    #allocation8 [shape = 'u8[65536]{0}', space=vmem, size = 0x10000, scoped, tag = 'input window, operand 5, single buffered']
    #allocation9 [shape = 's32[1]{0}', space=sflag, size = 0x4, scoped, tag = 'scoped memory for tpu_custom_call.1']
    #allocation10 [shape = 'u8[4096]{0}', space=vmem, size = 0x1000, scoped, tag = 'output window, operand 0, single buffered']
    %12 = vsyncpa [#allocation3], 0
    %13 = vsyncpa [#allocation6], 0
    %14 = vsyncpa [#allocation9], 0
    %15 = vsyncpa [#allocation4], 0
    // Predicated region
    $region2: #{tpu_custom_call.1} parent=1 // pred_check
      _
    $region3: #{tpu_custom_call.1} parent=1 // pred_check_branch
      %17 = sbr.rel (0) target = $region5
    $region4: #{tpu_custom_call.1} parent=1 // pred_region
      %19 = vsyncadd [#allocation3], 0
      %s21 = sshll.u32 %s0, 4
      %s22 = int_to_ptr.hbm [resolvable:$true] %s21
      %s23 = sshll.u32 [#allocation2], 4
      %s24 = int_to_ptr.vmem [resolvable:$true] %s23
      %26 = dma.hbm_to_vmem [thread:$0]  %s22, 128, %s24, [#allocation3]
    $region5: #{tpu_custom_call.1} parent=1 // pred_fallthru
      _
    // Predicated region
    $region6: #{tpu_custom_call.1} parent=1 // pred_check
      _
    $region7: #{tpu_custom_call.1} parent=1 // pred_check_branch
      %28 = sbr.rel (0) target = $region9
    $region8: #{tpu_custom_call.1} parent=1 // pred_region
      %30 = vsyncadd [#allocation6], 0
      %s31 = sshll.u32 %s1, 4
      %s32 = int_to_ptr.hbm [resolvable:$true] %s31
      %s33 = sshll.u32 [#allocation5], 4
      %s34 = int_to_ptr.vmem [resolvable:$true] %s33
      %39 = dma.hbm_to_vmem [thread:$0]  %s32, 512, %s34, [#allocation6], 128, 128, 8
    $region9: #{tpu_custom_call.1} parent=1 // pred_fallthru
      _
    // Predicated region
    $region10: #{tpu_custom_call.1} parent=1 // pred_check
      _
    $region11: #{tpu_custom_call.1} parent=1 // pred_check_branch
      %41 = sbr.rel (0) target = $region13
    $region12: #{tpu_custom_call.1} parent=1 // pred_region
      _
    $region13: #{tpu_custom_call.1} parent=1 // pred_fallthru
      _
    // Predicated region
    $region14: #{tpu_custom_call.1} parent=1 // pred_check
      _
    $region15: #{tpu_custom_call.1} parent=1 // pred_check_branch
      %43 = sbr.rel (0) target = $region17
    $region16: #{tpu_custom_call.1} parent=1 // pred_region
      %45 = vsyncadd [#allocation6], 0
      %s46 = sshll.u32 %s3, 4
      %s47 = int_to_ptr.hbm [resolvable:$true] %s46
      %s48 = sshll.u32 [#allocation7], 4
      %s49 = int_to_ptr.vmem [resolvable:$true] %s48
      %54 = dma.hbm_to_vmem [thread:$0]  %s47, 2048, %s49, [#allocation6], 128, 128, 8
    $region17: #{tpu_custom_call.1} parent=1 // pred_fallthru
      _
    // Predicated region
    $region18: #{tpu_custom_call.1} parent=1 // pred_check
      _
    $region19: #{tpu_custom_call.1} parent=1 // pred_check_branch
      %56 = sbr.rel (0) target = $region21
    $region20: #{tpu_custom_call.1} parent=1 // pred_region
      _
    $region21: #{tpu_custom_call.1} parent=1 // pred_fallthru
      _
    // Predicated region
    $region22: #{tpu_custom_call.1} parent=1 // pred_check
      _
    $region23: #{tpu_custom_call.1} parent=1 // pred_check_branch
      %58 = sbr.rel (0) target = $region25
    $region24: #{tpu_custom_call.1} parent=1 // pred_region
      %60 = vsyncadd [#allocation9], 0
      %s61 = sshll.u32 %s5, 4
      %s62 = int_to_ptr.hbm [resolvable:$true] %s61
      %s63 = sshll.u32 [#allocation8], 4
      %s64 = int_to_ptr.vmem [resolvable:$true] %s63
      %69 = dma.hbm_to_vmem [thread:$0]  %s62, 2048, %s64, [#allocation9], 128, 128, 8
    $region25: #{tpu_custom_call.1} parent=1 // pred_fallthru
      _
    // Predicated region
    $region26: #{tpu_custom_call.1} parent=1 // pred_check
      _
    $region27: #{tpu_custom_call.1} parent=1 // pred_check_branch
      %71 = sbr.rel (0) target = $region29
    $region28: #{tpu_custom_call.1} parent=1 // pred_region
      _
    $region29: #{tpu_custom_call.1} parent=1 // pred_fallthru
      _
    // Predicated region
    $region30: #{tpu_custom_call.1} parent=1 // pred_check
      _
    $region31: #{tpu_custom_call.1} parent=1 // pred_check_branch
      %73 = sbr.rel (0) target = $region33
    $region32: #{tpu_custom_call.1} parent=1 // pred_region
      %75 = dma.done [#allocation3], 128
    $region33: #{tpu_custom_call.1} parent=1 // pred_fallthru
      _
    // Predicated region
    $region34: #{tpu_custom_call.1} parent=1 // pred_check
      _
    $region35: #{tpu_custom_call.1} parent=1 // pred_check_branch
      %77 = sbr.rel (0) target = $region37
    $region36: #{tpu_custom_call.1} parent=1 // pred_region
      %79 = dma.done [#allocation6], 512
    $region37: #{tpu_custom_call.1} parent=1 // pred_fallthru
      _
    // Predicated region
    $region38: #{tpu_custom_call.1} parent=1 // pred_check
      _
    $region39: #{tpu_custom_call.1} parent=1 // pred_check_branch
      %81 = sbr.rel (0) target = $region41
    $region40: #{tpu_custom_call.1} parent=1 // pred_region
      %83 = dma.done [#allocation6], 2048
    $region41: #{tpu_custom_call.1} parent=1 // pred_fallthru
      _
    // Predicated region
    $region42: #{tpu_custom_call.1} parent=1 // pred_check
      _
    $region43: #{tpu_custom_call.1} parent=1 // pred_check_branch
      %85 = sbr.rel (0) target = $region45
    $region44: #{tpu_custom_call.1} parent=1 // pred_region
      %87 = dma.done [#allocation9], 2048
    $region45: #{tpu_custom_call.1} parent=1 // pred_fallthru
      _
    %v88 = vld [vmem:[#allocation2] sm:$0xff]
    %v89 = vld [vmem:[#allocation5] sm:$0xff]
    %v90 = vld [vmem:[#allocation5 + $0x8] sm:$0xff]
    %v91 = vld [vmem:[#allocation5 + $0x10] sm:$0xff]
    %v92 = vld [vmem:[#allocation5 + $0x18] sm:$0xff]
    %v93 = vld [vmem:[%s2] sm:$0x1]
    %v95 = vperm.slane %v93, 0
    %vm97 = vcmask 261120
    %v99 = vsel %vm97, %v88, 0
    %101 = vmatpush.msra.mxu0 0.0
    %102 = vmatpush.msra.mxu0 0.0
    %103 = vmatpush.msra.mxu0 0.0
    %104 = vmatpush.msra.mxu0 0.0
    %105 = vmatpush.msra.mxu0 0.0
    %106 = vmatpush.msra.mxu0 0.0
    %107 = vmatpush.msra.mxu0 0.0
    %108 = vmatpush.msra.mxu0 0.0
    %109 = vmatpush.msra.mxu0 0.0
    %110 = vmatpush.msra.mxu0 0.0
    %111 = vmatpush.msra.mxu0 0.0
    %112 = vmatpush.msra.mxu0 0.0
    %113 = vmatpush.msra.mxu0 %v92
    %114 = vmatpush.msra.mxu0 %v91
    %115 = vmatpush.msra.mxu0 %v90
    %116 = vmatpush.msra.mxu0 %v89
    %117 = vmatmul.f32.gmra.mxu0 %v99
    %v118 = vpop.f32.mrf.mxu0
    %v119 = vadd.f32 %v95, %v118
    %120 = vdwg.mxu0
    %v121 = vmax.f32 %v119, 0.0
    %v122 = vld [vmem:[#allocation7] sm:$0xff]
    %v123 = vld [vmem:[#allocation7 + $0x8] sm:$0xff]
    %v124 = vld [vmem:[#allocation7 + $0x10] sm:$0xff]
    %v125 = vld [vmem:[#allocation7 + $0x18] sm:$0xff]
    %v126 = vld [vmem:[#allocation7 + $0x20] sm:$0xff]
    %v127 = vld [vmem:[#allocation7 + $0x28] sm:$0xff]
    %v128 = vld [vmem:[#allocation7 + $0x30] sm:$0xff]
    %v129 = vld [vmem:[#allocation7 + $0x38] sm:$0xff]
    %v130 = vld [vmem:[#allocation7 + $0x40] sm:$0xff]
    %v131 = vld [vmem:[#allocation7 + $0x48] sm:$0xff]
    %v132 = vld [vmem:[#allocation7 + $0x50] sm:$0xff]
    %v133 = vld [vmem:[#allocation7 + $0x58] sm:$0xff]
    %v134 = vld [vmem:[#allocation7 + $0x60] sm:$0xff]
    %v135 = vld [vmem:[#allocation7 + $0x68] sm:$0xff]
    %v136 = vld [vmem:[#allocation7 + $0x70] sm:$0xff]
    %v137 = vld [vmem:[#allocation7 + $0x78] sm:$0xff]
    %v138 = vld [vmem:[%s4] sm:$0x1]
    %v140 = vperm.slane %v138, 0
    %142 = vmatpush.msra.mxu0 %v137
    %143 = vmatpush.msra.mxu0 %v136
    %144 = vmatpush.msra.mxu0 %v135
    %145 = vmatpush.msra.mxu0 %v134
    %146 = vmatpush.msra.mxu0 %v133
    %147 = vmatpush.msra.mxu0 %v132
    %148 = vmatpush.msra.mxu0 %v131
    %149 = vmatpush.msra.mxu0 %v130
    %150 = vmatpush.msra.mxu0 %v129
    %151 = vmatpush.msra.mxu0 %v128
    %152 = vmatpush.msra.mxu0 %v127
    %153 = vmatpush.msra.mxu0 %v126
    %154 = vmatpush.msra.mxu0 %v125
    %155 = vmatpush.msra.mxu0 %v124
    %156 = vmatpush.msra.mxu0 %v123
    %157 = vmatpush.msra.mxu0 %v122
    %158 = vmatmul.f32.gmra.mxu0 %v121
    %v159 = vpop.f32.mrf.mxu0
    %v160 = vadd.f32 %v140, %v159
    %161 = vdwg.mxu0
    %v162 = vmax.f32 %v160, 0.0
    %v163 = vld [vmem:[#allocation8] sm:$0xff]
    %v164 = vld [vmem:[#allocation8 + $0x8] sm:$0xff]
    %v165 = vld [vmem:[#allocation8 + $0x10] sm:$0xff]
    %v166 = vld [vmem:[#allocation8 + $0x18] sm:$0xff]
    %v167 = vld [vmem:[#allocation8 + $0x20] sm:$0xff]
    %v168 = vld [vmem:[#allocation8 + $0x28] sm:$0xff]
    %v169 = vld [vmem:[#allocation8 + $0x30] sm:$0xff]
    %v170 = vld [vmem:[#allocation8 + $0x38] sm:$0xff]
    %v171 = vld [vmem:[#allocation8 + $0x40] sm:$0xff]
    %v172 = vld [vmem:[#allocation8 + $0x48] sm:$0xff]
    %v173 = vld [vmem:[#allocation8 + $0x50] sm:$0xff]
    %v174 = vld [vmem:[#allocation8 + $0x58] sm:$0xff]
    %v175 = vld [vmem:[#allocation8 + $0x60] sm:$0xff]
    %v176 = vld [vmem:[#allocation8 + $0x68] sm:$0xff]
    %v177 = vld [vmem:[#allocation8 + $0x70] sm:$0xff]
    %v178 = vld [vmem:[#allocation8 + $0x78] sm:$0xff]
    %v179 = vld [vmem:[%s6] sm:$0x1]
    %v181 = vperm.slane %v179, 0
    %183 = vmatpush.msra.mxu0 %v178
    %184 = vmatpush.msra.mxu0 %v177
    %185 = vmatpush.msra.mxu0 %v176
    %186 = vmatpush.msra.mxu0 %v175
    %187 = vmatpush.msra.mxu0 %v174
    %188 = vmatpush.msra.mxu0 %v173
    %189 = vmatpush.msra.mxu0 %v172
    %190 = vmatpush.msra.mxu0 %v171
    %191 = vmatpush.msra.mxu0 %v170
    %192 = vmatpush.msra.mxu0 %v169
    %193 = vmatpush.msra.mxu0 %v168
    %194 = vmatpush.msra.mxu0 %v167
    %195 = vmatpush.msra.mxu0 %v166
    %196 = vmatpush.msra.mxu0 %v165
    %197 = vmatpush.msra.mxu0 %v164
    %198 = vmatpush.msra.mxu0 %v163
    %199 = vmatmul.f32.gmra.mxu0 %v162
    %v200 = vpop.f32.mrf.mxu0
    %v201 = vadd.f32 %v181, %v200
    %202 = vdwg.mxu0
    %v203 = vmax.f32 %v201, 0.0
    %v204 = vlaneseq
    %v205 = vand.u32 %v204, 127
    %vm206 = vcmp.lt.s32.totalorder %v205, 16
    %v207 = vsel %vm206, %v203, -inf
    %208 = vmax.xlane.f32.xlu0 %v207
    %v209 = vpop.xlane.xlu0 %208
    %v210 = vsub.f32 %v207, %v209
    %v211 = vmul.f32 %v210, 1.442695
    %v212 = vpow.pop %v211
    %213 = vadd.xlane.f32.xlu0 %v212
    %v214 = vpop.xlane.xlu0 %213
    %v215 = vrcp.pop %v214
    %v216 = vmul.f32 %v214, %v215
    %v217 = vsub.f32 1.0, %v216
    %v218 = vmul.f32 %v215, %v217
    %v219 = vadd.f32 %v215, %v218
    %vm220 = vweird.f32 %v214
    %vm221 = vweird.f32 %v215
    %vm222 = vmor %vm220, %vm221
    %v223 = vsel %vm222, %v215, %v219
    %v224 = vand.u32 2147483647, %v214
    %vm225 = vcmp.eq.f32.partialorder %v224, 8.507059e+37
    %v226 = vand.u32 %v214, 2147483648
    %v227 = vor.u32 1.1754944e-38, %v226
    %v228 = vsel %vm225, %v227, %v223
    %v229 = vmul.f32 %v212, %v228
    %230 = vst [vmem:[#allocation10] sm:$0xff] %v229
    // Predicated region
    $region46: #{tpu_custom_call.1} parent=1 // pred_check
      _
    $region47: #{tpu_custom_call.1} parent=1 // pred_check_branch
      %232 = sbr.rel (0) target = $region49
    $region48: #{tpu_custom_call.1} parent=1 // pred_region
      %234 = vsyncadd [#allocation4], 0
      %s236 = sshll.u32 [#allocation10], 4
      %s237 = int_to_ptr.vmem [resolvable:$true] %s236
      %s238 = sshll.u32 %s7, 4
      %s239 = int_to_ptr.hbm [resolvable:$true] %s238
      %241 = dma.vmem_to_hbm [thread:$0]  %s237, 128, %s239, [#allocation4]
    $region49: #{tpu_custom_call.1} parent=1 // pred_fallthru
      _
    // Predicated region
    $region50: #{tpu_custom_call.1} parent=1 // pred_check
      _
    $region51: #{tpu_custom_call.1} parent=1 // pred_check_branch
      %243 = sbr.rel (0) target = $region53
    $region52: #{tpu_custom_call.1} parent=1 // pred_region
      %245 = dma.done [#allocation4], 128
    $region53: #{tpu_custom_call.1} parent=1 // pred_fallthru
      _
    %246 = vsyncpa [#allocation3], 1
    %247 = vsyncpa [#allocation6], 1
    %248 = vsyncpa [#allocation9], 1
    %249 = vsyncpa [#allocation4], 1

// kernel: tpu_custom_call.1
$region0: #{tpu_custom_call.1}
  #allocation0 [shape = 'u32[]', space=smem, size = 0x4, offset = 0x4, fixed_abs, tag = 'smem constant byte address 0x4 - core index']
  #allocation1 [shape = 'u32[72,128]{1,0:T(1,128)}', space=vmem, size = 0x9000, scoped, tag = 'internal scratch']
  %s0 = inlined_call_operand.hbm [shape: f32[8,32], index: 0, kind: input, shape index: {}]
  %s1 = inlined_call_operand.hbm [shape: f32[32,128], index: 1, kind: input, shape index: {}]
  %s2 = inlined_call_operand.vmem [shape: f32[1,128], index: 2, kind: input, shape index: {}]
  %s3 = inlined_call_operand.hbm [shape: f32[128,128], index: 3, kind: input, shape index: {}]
  %s4 = inlined_call_operand.vmem [shape: f32[1,128], index: 4, kind: input, shape index: {}]
  %s5 = inlined_call_operand.hbm [shape: f32[128,128], index: 5, kind: input, shape index: {}]
  %s6 = inlined_call_operand.vmem [shape: f32[1,128], index: 6, kind: input, shape index: {}]
  %s7 = inlined_call_operand.hbm [shape: f32[8,128], index: 7, kind: output, shape index: {}]
  %s8 = sld [smem:[#allocation0]]
  $region54: #{tpu_custom_call.1} parent=0
    _
  %s10 = ssub.s32 1, %s8
  %s11 = scalar_select 0, %s10, %s8
  $region1: #{tpu_custom_call.1} parent=0
    #allocation2 [shape = 'u8[4096]{0}', space=vmem, size = 0x1000, scoped, tag = 'input window, operand 0, single buffered']
    #allocation3 [shape = 's32[1]{0}', space=sflag, size = 0x4, scoped, tag = 'scoped memory for tpu_custom_call.1']
    #allocation4 [shape = 's32[1]{0}', space=sflag, size = 0x4, scoped, tag = 'scoped memory for tpu_custom_call.1']
    #allocation5 [shape = 'u8[16384]{0}', space=vmem, size = 0x4000, scoped, tag = 'input window, operand 1, single buffered']
    #allocation6 [shape = 's32[1]{0}', space=sflag, size = 0x4, scoped, tag = 'scoped memory for tpu_custom_call.1']
    #allocation7 [shape = 'u8[65536]{0}', space=vmem, size = 0x10000, scoped, tag = 'input window, operand 3, single buffered']
    #allocation8 [shape = 'u8[65536]{0}', space=vmem, size = 0x10000, scoped, tag = 'input window, operand 5, single buffered']
    #allocation9 [shape = 's32[1]{0}', space=sflag, size = 0x4, scoped, tag = 'scoped memory for tpu_custom_call.1']
    #allocation10 [shape = 'u8[4096]{0}', space=vmem, size = 0x1000, scoped, tag = 'output window, operand 0, single buffered']
    %12 = vsyncpa [#allocation3], 0
    %13 = vsyncpa [#allocation6], 0
    %14 = vsyncpa [#allocation9], 0
    %15 = vsyncpa [#allocation4], 0
    // Predicated region
    $region2: #{tpu_custom_call.1} parent=1 // pred_check
      _
    $region3: #{tpu_custom_call.1} parent=1 // pred_check_branch
      %17 = sbr.rel (0) target = $region5
    $region4: #{tpu_custom_call.1} parent=1 // pred_region
      %19 = vsyncadd [#allocation3], 0
      %s21 = sshll.u32 %s0, 4
      %s22 = int_to_ptr.hbm [resolvable:$true] %s21
      %s23 = sshll.u32 [#allocation2], 4
      %s24 = int_to_ptr.vmem [resolvable:$true] %s23
      %26 = dma.hbm_to_vmem [thread:$0]  %s22, 128, %s24, [#allocation3]
    $region5: #{tpu_custom_call.1} parent=1 // pred_fallthru
      _
    // Predicated region
    $region6: #{tpu_custom_call.1} parent=1 // pred_check
      _
    $region7: #{tpu_custom_call.1} parent=1 // pred_check_branch
      %28 = sbr.rel (0) target = $region9
    $region8: #{tpu_custom_call.1} parent=1 // pred_region
      %30 = vsyncadd [#allocation6], 0
      %s31 = sshll.u32 %s1, 4
      %s32 = int_to_ptr.hbm [resolvable:$true] %s31
      %s33 = sshll.u32 [#allocation5], 4
      %s34 = int_to_ptr.vmem [resolvable:$true] %s33
      %39 = dma.hbm_to_vmem [thread:$0]  %s32, 512, %s34, [#allocation6], 128, 128, 8
    $region9: #{tpu_custom_call.1} parent=1 // pred_fallthru
      _
    // Predicated region
    $region10: #{tpu_custom_call.1} parent=1 // pred_check
      _
    $region11: #{tpu_custom_call.1} parent=1 // pred_check_branch
      %41 = sbr.rel (0) target = $region13
    $region12: #{tpu_custom_call.1} parent=1 // pred_region
      _
    $region13: #{tpu_custom_call.1} parent=1 // pred_fallthru
      _
    // Predicated region
    $region14: #{tpu_custom_call.1} parent=1 // pred_check
      _
    $region15: #{tpu_custom_call.1} parent=1 // pred_check_branch
      %43 = sbr.rel (0) target = $region17
    $region16: #{tpu_custom_call.1} parent=1 // pred_region
      %45 = vsyncadd [#allocation6], 0
      %s46 = sshll.u32 %s3, 4
      %s47 = int_to_ptr.hbm [resolvable:$true] %s46
      %s48 = sshll.u32 [#allocation7], 4
      %s49 = int_to_ptr.vmem [resolvable:$true] %s48
      %54 = dma.hbm_to_vmem [thread:$0]  %s47, 2048, %s49, [#allocation6], 128, 128, 8
    $region17: #{tpu_custom_call.1} parent=1 // pred_fallthru
      _
    // Predicated region
    $region18: #{tpu_custom_call.1} parent=1 // pred_check
      _
    $region19: #{tpu_custom_call.1} parent=1 // pred_check_branch
      %56 = sbr.rel (0) target = $region21
    $region20: #{tpu_custom_call.1} parent=1 // pred_region
      _
    $region21: #{tpu_custom_call.1} parent=1 // pred_fallthru
      _
    // Predicated region
    $region22: #{tpu_custom_call.1} parent=1 // pred_check
      _
    $region23: #{tpu_custom_call.1} parent=1 // pred_check_branch
      %58 = sbr.rel (0) target = $region25
    $region24: #{tpu_custom_call.1} parent=1 // pred_region
      %60 = vsyncadd [#allocation9], 0
      %s61 = sshll.u32 %s5, 4
      %s62 = int_to_ptr.hbm [resolvable:$true] %s61
      %s63 = sshll.u32 [#allocation8], 4
      %s64 = int_to_ptr.vmem [resolvable:$true] %s63
      %69 = dma.hbm_to_vmem [thread:$0]  %s62, 2048, %s64, [#allocation9], 128, 128, 8
    $region25: #{tpu_custom_call.1} parent=1 // pred_fallthru
      _
    // Predicated region
    $region26: #{tpu_custom_call.1} parent=1 // pred_check
      _
    $region27: #{tpu_custom_call.1} parent=1 // pred_check_branch
      %71 = sbr.rel (0) target = $region29
    $region28: #{tpu_custom_call.1} parent=1 // pred_region
      _
    $region29: #{tpu_custom_call.1} parent=1 // pred_fallthru
      _
    // Predicated region
    $region30: #{tpu_custom_call.1} parent=1 // pred_check
      _
    $region31: #{tpu_custom_call.1} parent=1 // pred_check_branch
      %73 = sbr.rel (0) target = $region33
    $region32: #{tpu_custom_call.1} parent=1 // pred_region
      %75 = dma.done [#allocation3], 128
    $region33: #{tpu_custom_call.1} parent=1 // pred_fallthru
      _
    // Predicated region
    $region34: #{tpu_custom_call.1} parent=1 // pred_check
      _
    $region35: #{tpu_custom_call.1} parent=1 // pred_check_branch
      %77 = sbr.rel (0) target = $region37
    $region36: #{tpu_custom_call.1} parent=1 // pred_region
      %79 = dma.done [#allocation6], 512
    $region37: #{tpu_custom_call.1} parent=1 // pred_fallthru
      _
    // Predicated region
    $region38: #{tpu_custom_call.1} parent=1 // pred_check
      _
    $region39: #{tpu_custom_call.1} parent=1 // pred_check_branch
      %81 = sbr.rel (0) target = $region41
    $region40: #{tpu_custom_call.1} parent=1 // pred_region
      %83 = dma.done [#allocation6], 2048
    $region41: #{tpu_custom_call.1} parent=1 // pred_fallthru
      _
    // Predicated region
    $region42: #{tpu_custom_call.1} parent=1 // pred_check
      _
    $region43: #{tpu_custom_call.1} parent=1 // pred_check_branch
      %85 = sbr.rel (0) target = $region45
    $region44: #{tpu_custom_call.1} parent=1 // pred_region
      %87 = dma.done [#allocation9], 2048
    $region45: #{tpu_custom_call.1} parent=1 // pred_fallthru
      _
    %v88 = vld [vmem:[#allocation2] sm:$0xff]
    %v89 = vld [vmem:[#allocation5] sm:$0xff]
    %v90 = vld [vmem:[#allocation5 + $0x8] sm:$0xff]
    %v91 = vld [vmem:[#allocation5 + $0x10] sm:$0xff]
    %v92 = vld [vmem:[#allocation5 + $0x18] sm:$0xff]
    %v93 = vld [vmem:[%s2] sm:$0x1]
    %v95 = vperm.slane %v93, 0
    %vm97 = vcmask 261120
    %v99 = vsel %vm97, %v88, 0
    %101 = vmatpush.msra.mxu0 0.0
    %102 = vmatpush.msra.mxu0 0.0
    %103 = vmatpush.msra.mxu0 0.0
    %104 = vmatpush.msra.mxu0 0.0
    %105 = vmatpush.msra.mxu0 0.0
    %106 = vmatpush.msra.mxu0 0.0
    %107 = vmatpush.msra.mxu0 0.0
    %108 = vmatpush.msra.mxu0 0.0
    %109 = vmatpush.msra.mxu0 0.0
    %110 = vmatpush.msra.mxu0 0.0
    %111 = vmatpush.msra.mxu0 0.0
    %112 = vmatpush.msra.mxu0 0.0
    %113 = vmatpush.msra.mxu0 %v92
    %114 = vmatpush.msra.mxu0 %v91
    %115 = vmatpush.msra.mxu0 %v90
    %116 = vmatpush.msra.mxu0 %v89
    %117 = vmatmul.f32.gmra.mxu0 %v99
    %v118 = vpop.f32.mrf.mxu0
    %v119 = vadd.f32 %v95, %v118
    %120 = vdwg.mxu0
    %v121 = vmax.f32 %v119, 0.0
    %v122 = vld [vmem:[#allocation7] sm:$0xff]
    %v123 = vld [vmem:[#allocation7 + $0x8] sm:$0xff]
    %v124 = vld [vmem:[#allocation7 + $0x10] sm:$0xff]
    %v125 = vld [vmem:[#allocation7 + $0x18] sm:$0xff]
    %v126 = vld [vmem:[#allocation7 + $0x20] sm:$0xff]
    %v127 = vld [vmem:[#allocation7 + $0x28] sm:$0xff]
    %v128 = vld [vmem:[#allocation7 + $0x30] sm:$0xff]
    %v129 = vld [vmem:[#allocation7 + $0x38] sm:$0xff]
    %v130 = vld [vmem:[#allocation7 + $0x40] sm:$0xff]
    %v131 = vld [vmem:[#allocation7 + $0x48] sm:$0xff]
    %v132 = vld [vmem:[#allocation7 + $0x50] sm:$0xff]
    %v133 = vld [vmem:[#allocation7 + $0x58] sm:$0xff]
    %v134 = vld [vmem:[#allocation7 + $0x60] sm:$0xff]
    %v135 = vld [vmem:[#allocation7 + $0x68] sm:$0xff]
    %v136 = vld [vmem:[#allocation7 + $0x70] sm:$0xff]
    %v137 = vld [vmem:[#allocation7 + $0x78] sm:$0xff]
    %v138 = vld [vmem:[%s4] sm:$0x1]
    %v140 = vperm.slane %v138, 0
    %142 = vmatpush.msra.mxu0 %v137
    %143 = vmatpush.msra.mxu0 %v136
    %144 = vmatpush.msra.mxu0 %v135
    %145 = vmatpush.msra.mxu0 %v134
    %146 = vmatpush.msra.mxu0 %v133
    %147 = vmatpush.msra.mxu0 %v132
    %148 = vmatpush.msra.mxu0 %v131
    %149 = vmatpush.msra.mxu0 %v130
    %150 = vmatpush.msra.mxu0 %v129
    %151 = vmatpush.msra.mxu0 %v128
    %152 = vmatpush.msra.mxu0 %v127
    %153 = vmatpush.msra.mxu0 %v126
    %154 = vmatpush.msra.mxu0 %v125
    %155 = vmatpush.msra.mxu0 %v124
    %156 = vmatpush.msra.mxu0 %v123
    %157 = vmatpush.msra.mxu0 %v122
    %158 = vmatmul.f32.gmra.mxu0 %v121
    %v159 = vpop.f32.mrf.mxu0
    %v160 = vadd.f32 %v140, %v159
    %161 = vdwg.mxu0
    %v162 = vmax.f32 %v160, 0.0
    %v163 = vld [vmem:[#allocation8] sm:$0xff]
    %v164 = vld [vmem:[#allocation8 + $0x8] sm:$0xff]
    %v165 = vld [vmem:[#allocation8 + $0x10] sm:$0xff]
    %v166 = vld [vmem:[#allocation8 + $0x18] sm:$0xff]
    %v167 = vld [vmem:[#allocation8 + $0x20] sm:$0xff]
    %v168 = vld [vmem:[#allocation8 + $0x28] sm:$0xff]
    %v169 = vld [vmem:[#allocation8 + $0x30] sm:$0xff]
    %v170 = vld [vmem:[#allocation8 + $0x38] sm:$0xff]
    %v171 = vld [vmem:[#allocation8 + $0x40] sm:$0xff]
    %v172 = vld [vmem:[#allocation8 + $0x48] sm:$0xff]
    %v173 = vld [vmem:[#allocation8 + $0x50] sm:$0xff]
    %v174 = vld [vmem:[#allocation8 + $0x58] sm:$0xff]
    %v175 = vld [vmem:[#allocation8 + $0x60] sm:$0xff]
    %v176 = vld [vmem:[#allocation8 + $0x68] sm:$0xff]
    %v177 = vld [vmem:[#allocation8 + $0x70] sm:$0xff]
    %v178 = vld [vmem:[#allocation8 + $0x78] sm:$0xff]
    %v179 = vld [vmem:[%s6] sm:$0x1]
    %v181 = vperm.slane %v179, 0
    %183 = vmatpush.msra.mxu0 %v178
    %184 = vmatpush.msra.mxu0 %v177
    %185 = vmatpush.msra.mxu0 %v176
    %186 = vmatpush.msra.mxu0 %v175
    %187 = vmatpush.msra.mxu0 %v174
    %188 = vmatpush.msra.mxu0 %v173
    %189 = vmatpush.msra.mxu0 %v172
    %190 = vmatpush.msra.mxu0 %v171
    %191 = vmatpush.msra.mxu0 %v170
    %192 = vmatpush.msra.mxu0 %v169
    %193 = vmatpush.msra.mxu0 %v168
    %194 = vmatpush.msra.mxu0 %v167
    %195 = vmatpush.msra.mxu0 %v166
    %196 = vmatpush.msra.mxu0 %v165
    %197 = vmatpush.msra.mxu0 %v164
    %198 = vmatpush.msra.mxu0 %v163
    %199 = vmatmul.f32.gmra.mxu0 %v162
    %v200 = vpop.f32.mrf.mxu0
    %v201 = vadd.f32 %v181, %v200
    %202 = vdwg.mxu0
    %v203 = vmax.f32 %v201, 0.0
    %v204 = vlaneseq
    %v205 = vand.u32 %v204, 127
    %vm206 = vcmp.lt.s32.totalorder %v205, 16
    %v207 = vsel %vm206, %v203, -inf
    %208 = vmax.xlane.f32.xlu0 %v207
    %v209 = vpop.xlane.xlu0 %208
    %v210 = vsub.f32 %v207, %v209
    %v211 = vmul.f32 %v210, 1.442695
    %v212 = vpow.pop %v211
    %213 = vadd.xlane.f32.xlu0 %v212
    %v214 = vpop.xlane.xlu0 %213
    %v215 = vrcp.pop %v214
    %v216 = vmul.f32 %v214, %v215
    %v217 = vsub.f32 1.0, %v216
    %v218 = vmul.f32 %v215, %v217
    %v219 = vadd.f32 %v215, %v218
    %vm220 = vweird.f32 %v214
    %vm221 = vweird.f32 %v215
    %vm222 = vmor %vm220, %vm221
    %v223 = vsel %vm222, %v215, %v219
    %v224 = vand.u32 2147483647, %v214
    %vm225 = vcmp.eq.f32.partialorder %v224, 8.507059e+37
    %v226 = vand.u32 %v214, 2147483648
    %v227 = vor.u32 1.1754944e-38, %v226
    %v228 = vsel %vm225, %v227, %v223
    %v229 = vmul.f32 %v212, %v228
    %230 = vst [vmem:[#allocation10] sm:$0xff] %v229
    // Predicated region
    $region46: #{tpu_custom_call.1} parent=1 // pred_check
      _
    $region47: #{tpu_custom_call.1} parent=1 // pred_check_branch
      %232 = sbr.rel (0) target = $region49
    $region48: #{tpu_custom_call.1} parent=1 // pred_region
      %234 = vsyncadd [#allocation4], 0
      %s236 = sshll.u32 [#allocation10], 4
      %s237 = int_to_ptr.vmem [resolvable:$true] %s236
      %s238 = sshll.u32 %s7, 4
      %s239 = int_to_ptr.hbm [resolvable:$true] %s238
      %241 = dma.vmem_to_hbm [thread:$0]  %s237, 128, %s239, [#allocation4]
    $region49: #{tpu_custom_call.1} parent=1 // pred_fallthru
      _
    // Predicated region
    $region50: #{tpu_custom_call.1} parent=1 // pred_check
      _
    $region51: #{tpu_custom_call.1} parent=1 // pred_check_branch
      %243 = sbr.rel (0) target = $region53
    $region52: #{tpu_custom_call.1} parent=1 // pred_region
      %245 = dma.done [#allocation4], 128
    $region53: #{tpu_custom_call.1} parent=1 // pred_fallthru
      _
    %246 = vsyncpa [#allocation3], 1
    %247 = vsyncpa [#allocation6], 1
    %248 = vsyncpa [#allocation9], 1
    %249 = vsyncpa [#allocation4], 1

</llo_original>
